<compile_context>
chip_gen: v6e
topology: v6e:2x2x1
jax: 0.10.0
libtpu: 0.0.40
codegen_flags: <defaults>
</compile_context>

<pallas_src>
from functools import partial

import jax
import jax.numpy as jnp
from jax.experimental import pallas as pl
from jax.experimental.pallas import tpu as pltpu

BN_EPS = 1e-5
LANE = 128
SUBLANE = 8


def _round_up(n, m):
    return ((n + m - 1) // m) * m


# ---------------------------------------------------------------------------
# Kernel: one grid step == one Block (Linear -> SiLU -> BN).
# Refs: x_ref (B_pad, f_max) f32, w_ref (1, f_max, f_max) bf16,
#       v_ref (1, 8, f_max) f32 (row0=bias, row1=gamma, row2=beta),
#       o_ref (B_pad, f_max) f32, act_ref VMEM scratch (B_pad, f_max) f32.
# ---------------------------------------------------------------------------
def _make_stack_kernel(b_true, b_pad):
    def kernel(x_ref, w_ref, v_ref, o_ref, act_ref):
        l = pl.program_id(0)

        @pl.when(l == 0)
        def _():
            act_ref[...] = x_ref[...]

        wt = w_ref[0]                     # (f_max, f_max) bf16, pre-transposed W^T
        vecs = v_ref[0]                   # (8, f_max) f32
        bias = vecs[0:1, :]               # (1, f_max)
        gamma = vecs[1:2, :]
        beta = vecs[2:3, :]

        # Linear (bf16 operands on the MXU, f32 accumulation) + bias
        y = jnp.dot(act_ref[...].astype(jnp.bfloat16), wt,
                    preferred_element_type=jnp.float32) + bias
        # SiLU
        y = y * jax.nn.sigmoid(y)

        # BatchNorm1d training-mode stats over the TRUE batch rows only.
        if b_pad != b_true:
            row_ids = jax.lax.broadcasted_iota(jnp.int32, y.shape, 0)
            ym = jnp.where(row_ids < b_true, y, 0.0)
        else:
            ym = y
        inv_b = jnp.float32(1.0 / b_true)
        mean = jnp.sum(ym, axis=0, keepdims=True) * inv_b
        mean_sq = jnp.sum(ym * ym, axis=0, keepdims=True) * inv_b
        var = jnp.maximum(mean_sq - mean * mean, 0.0)

        # Fused BN affine: y = y * s + t
        s = gamma * jax.lax.rsqrt(var + BN_EPS)
        t = beta - mean * s
        y = y * s + t

        act_ref[...] = y

        @pl.when(l == pl.num_programs(0) - 1)
        def _():
            o_ref[...] = y.astype(o_ref.dtype)

    return kernel


# ---------------------------------------------------------------------------
# Parameter handling
# ---------------------------------------------------------------------------
def init_linear_stack_params(key, in_features, num_units):
    """PyTorch-like logical parameters: per Block (w (out,in), b, gamma, beta)."""
    params = []
    f_in = in_features
    for f_out in num_units:
        key, kw, kb = jax.random.split(key, 3)
        bound = 1.0 / jnp.sqrt(jnp.float32(f_in))   # torch.nn.Linear default-ish init
        w = jax.random.uniform(kw, (f_out, f_in), jnp.float32, -bound, bound)
        b = jax.random.uniform(kb, (f_out,), jnp.float32, -bound, bound)
        gamma = jnp.ones((f_out,), jnp.float32)     # BatchNorm1d weight
        beta = jnp.zeros((f_out,), jnp.float32)     # BatchNorm1d bias
        params.append((w, b, gamma, beta))
        f_in = f_out
    return params


def prepare_params(params, in_features):
    """One-time prep: transpose weights, cast to bf16, zero-pad every layer to a
    common lane-dense f_max, and stack:
      w_stack : (L, f_max, f_max) bf16   (layer l's W^T in the top-left corner)
      v_stack : (L, 8, f_max) f32        (row0=bias, row1=gamma, row2=beta)"""
    dims = [in_features] + [w.shape[0] for (w, _, _, _) in params]
    f_max = _round_up(max(dims), LANE)
    L = len(params)

    w_stack = jnp.zeros((L, f_max, f_max), jnp.bfloat16)
    v_stack = jnp.zeros((L, SUBLANE, f_max), jnp.float32)

    f_in = in_features
    for i, (w, b, gamma, beta) in enumerate(params):
        f_out = w.shape[0]
        w_stack = w_stack.at[i, :f_in, :f_out].set(w.T.astype(jnp.bfloat16))
        v_stack = v_stack.at[i, 0, :f_out].set(b)
        v_stack = v_stack.at[i, 1, :f_out].set(gamma)
        v_stack = v_stack.at[i, 2, :f_out].set(beta)
        f_in = f_out
    return w_stack, v_stack


# ---------------------------------------------------------------------------
# Forward
# ---------------------------------------------------------------------------
@partial(jax.jit, static_argnames=("out_features",))
def linear_stack_forward(x, w_stack, v_stack, *, out_features):
    """LinearStack.forward: one fused Pallas kernel, grid over the Blocks."""
    B, f_in = x.shape
    L, f_max, _ = w_stack.shape

    b_pad = _round_up(max(B, SUBLANE), SUBLANE)
    x_p = jnp.zeros((b_pad, f_max), jnp.float32).at[:B, :f_in].set(x)

    # Actual VMEM footprint (double-buffered per-layer tiles + resident batch blocks)
    vmem_bytes = (
        2 * f_max * f_max * 2          # weight tile, bf16, double-buffered
        + 2 * SUBLANE * f_max * 4      # bias/gamma/beta tile, double-buffered
        + 2 * b_pad * f_max * 4        # x block
        + 2 * b_pad * f_max * 4        # output block
        + b_pad * f_max * 4            # activation scratch
    )
    vmem_limit = int(min(64 * 1024 * 1024, max(2 * vmem_bytes, 16 * 1024 * 1024)))

    out_p = pl.pallas_call(
        _make_stack_kernel(B, b_pad),
        out_shape=jax.ShapeDtypeStruct((b_pad, f_max), jnp.float32),
        grid_spec=pltpu.PrefetchScalarGridSpec(
            num_scalar_prefetch=0,
            grid=(L,),
            in_specs=[
                pl.BlockSpec((b_pad, f_max), lambda l: (0, 0)),
                pl.BlockSpec((1, f_max, f_max), lambda l: (l, 0, 0)),
                pl.BlockSpec((1, SUBLANE, f_max), lambda l: (l, 0, 0)),
            ],
            out_specs=pl.BlockSpec((b_pad, f_max), lambda l: (0, 0)),
            scratch_shapes=[pltpu.VMEM((b_pad, f_max), jnp.float32)],
        ),
        compiler_params=pltpu.CompilerParams(
            dimension_semantics=("arbitrary",),   # layer axis is a sequential carry
            vmem_limit_bytes=vmem_limit,
        ),
    )(x_p, w_stack, v_stack)

    return out_p[:B, :out_features]


# ---------------------------------------------------------------------------
# Pure-JAX reference (same math in f32, plain XLA ops) for a sanity check.
# ---------------------------------------------------------------------------
def _reference_forward(x, params):
    for (w, b, gamma, beta) in params:
        y = x @ w.T + b
        y = y * jax.nn.sigmoid(y)
        mean = jnp.mean(y, axis=0, keepdims=True)
        var = jnp.mean((y - mean) ** 2, axis=0, keepdims=True)
        x = (y - mean) * jax.lax.rsqrt(var + BN_EPS) * gamma + beta
    return x


if __name__ == "__main__":
    key = jax.random.PRNGKey(0)
    key, kx = jax.random.split(key)

    B, in_features = 8, 32
    num_units = [64, 32]          # two Blocks; LazyLinear infers in_features

    x = jax.random.normal(kx, (B, in_features), jnp.float32)
    params = init_linear_stack_params(key, in_features, num_units)
    w_stack, v_stack = prepare_params(params, in_features)

    out = linear_stack_forward(x, w_stack, v_stack, out_features=num_units[-1])
    out = jax.block_until_ready(out)

    assert out.shape == (B, num_units[-1]), out.shape
    assert bool(jnp.all(jnp.isfinite(out)))

    ref = _reference_forward(x, params)
    max_diff = float(jnp.max(jnp.abs(out - ref)))
    assert max_diff < 1e-1, f"max diff vs reference too large: {max_diff}"

    print("KERNEL_OK")
</pallas_src>

<mosaic_0001>
module attributes {stable_mosaic.version = 11 : i64} {
  func.func @kernel(%arg0: i32, %arg1: memref<8x128xf32, #tpu.memory_space<vmem>>, %arg2: memref<1x128x128xbf16, #tpu.memory_space<vmem>>, %arg3: memref<1x8x128xf32, #tpu.memory_space<vmem>>, %arg4: memref<8x128xf32, #tpu.memory_space<vmem>>, %arg5: memref<8x128xf32, #tpu.memory_space<vmem>>) attributes {dimension_semantics = [#tpu.dimension_semantics<arbitrary>], iteration_bounds = array<i64: 2>, scalar_prefetch = 0 : i64, scratch_operands = 1 : i64, tpu.core_type = #tpu.core_type<tc>, window_params = [{pipeline_mode = #tpu.pipeline_mode<synchronous>, transform_indices = @transform_0, window_bounds = array<i64: 8, 128>}, {transform_indices = @transform_1, window_bounds = array<i64: 1, 128, 128>}, {transform_indices = @transform_2, window_bounds = array<i64: 1, 8, 128>}, {pipeline_mode = #tpu.pipeline_mode<synchronous>, transform_indices = @transform_3, window_bounds = array<i64: 8, 128>}]} {
    %c0_i32 = arith.constant 0 : i32
    %0 = arith.cmpi eq, %arg0, %c0_i32 : i32
    %1 = arith.extui %0 : i1 to i32
    %c0_i32_0 = arith.constant 0 : i32
    %2 = arith.cmpi ne, %1, %c0_i32_0 : i32
    scf.if %2 {
      %c0_18 = arith.constant 0 : index
      %c0_19 = arith.constant 0 : index
      %48 = vector.load %arg1[%c0_18, %c0_19] : memref<8x128xf32, #tpu.memory_space<vmem>>, vector<8x128xf32>
      %c0_20 = arith.constant 0 : index
      %c0_21 = arith.constant 0 : index
      %49 = vector.load %arg5[%c0_20, %c0_21] : memref<8x128xf32, #tpu.memory_space<vmem>>, vector<8x128xf32>
      tpu.vector_store %arg5[%c0_20, %c0_21], %48 {strides = array<i32>} : memref<8x128xf32, #tpu.memory_space<vmem>>, vector<8x128xf32>,
    } else {
    }
    %c0 = arith.constant 0 : index
    %c0_1 = arith.constant 0 : index
    %c0_2 = arith.constant 0 : index
    %3 = vector.load %arg2[%c0, %c0_1, %c0_2] : memref<1x128x128xbf16, #tpu.memory_space<vmem>>, vector<1x128x128xbf16>
    %4 = vector.shape_cast %3 : vector<1x128x128xbf16> to vector<128x128xbf16>
    %c0_3 = arith.constant 0 : index
    %c0_4 = arith.constant 0 : index
    %c0_5 = arith.constant 0 : index
    %5 = vector.load %arg3[%c0_3, %c0_4, %c0_5] : memref<1x8x128xf32, #tpu.memory_space<vmem>>, vector<1x8x128xf32>
    %6 = vector.shape_cast %5 : vector<1x8x128xf32> to vector<8x128xf32>
    %7 = vector.extract_strided_slice %6 {offsets = [0, 0], sizes = [1, 128], strides = [1, 1]} : vector<8x128xf32> to vector<1x128xf32>
    %8 = vector.extract_strided_slice %6 {offsets = [1, 0], sizes = [1, 128], strides = [1, 1]} : vector<8x128xf32> to vector<1x128xf32>
    %9 = vector.extract_strided_slice %6 {offsets = [2, 0], sizes = [1, 128], strides = [1, 1]} : vector<8x128xf32> to vector<1x128xf32>
    %c0_6 = arith.constant 0 : index
    %c0_7 = arith.constant 0 : index
    %10 = vector.load %arg5[%c0_6, %c0_7] : memref<8x128xf32, #tpu.memory_space<vmem>>, vector<8x128xf32>
    %11 = arith.truncf %10 : vector<8x128xf32> to vector<8x128xbf16>
    %cst = arith.constant dense<0.000000e+00> : vector<8x128xf32>
    %12 = tpu.matmul %11, %4, %cst {dimension_numbers = #tpu.dot_dimension_numbers<[1], [0], [0], [1], [0, 0, 1, 1], [], []>} : vector<8x128xbf16>, vector<128x128xbf16>, vector<8x128xf32> -> vector<8x128xf32>
    %13 = vector.broadcast %7 : vector<1x128xf32> to vector<8x128xf32>
    %14 = arith.addf %12, %13 : vector<8x128xf32>
    %15 = arith.negf %14 : vector<8x128xf32>
    %16 = math.exp %15 : vector<8x128xf32>
    %cst_8 = arith.constant 1.000000e+00 : f32
    %17 = vector.broadcast %cst_8 : f32 to vector<8x128xf32>
    %18 = arith.addf %17, %16 : vector<8x128xf32>
    %19 = arith.divf %17, %18 : vector<8x128xf32>
    %20 = arith.mulf %14, %19 : vector<8x128xf32>
    %cst_9 = arith.constant dense<0.000000e+00> : vector<128xf32>
    %21 = vector.multi_reduction <add>, %20, %cst_9 [0] : vector<8x128xf32> to vector<128xf32>
    %22 = vector.shape_cast %21 : vector<128xf32> to vector<1x128xf32>
    %cst_10 = arith.constant 1.250000e-01 : f32
    %23 = vector.broadcast %cst_10 : f32 to vector<1x128xf32>
    %24 = arith.mulf %22, %23 : vector<1x128xf32>
    %25 = arith.mulf %20, %20 : vector<8x128xf32>
    %cst_11 = arith.constant dense<0.000000e+00> : vector<128xf32>
    %26 = vector.multi_reduction <add>, %25, %cst_11 [0] : vector<8x128xf32> to vector<128xf32>
    %27 = vector.shape_cast %26 : vector<128xf32> to vector<1x128xf32>
    %cst_12 = arith.constant 1.250000e-01 : f32
    %28 = vector.broadcast %cst_12 : f32 to vector<1x128xf32>
    %29 = arith.mulf %27, %28 : vector<1x128xf32>
    %30 = arith.mulf %24, %24 : vector<1x128xf32>
    %31 = arith.subf %29, %30 : vector<1x128xf32>
    %cst_13 = arith.constant 0.000000e+00 : f32
    %32 = vector.broadcast %cst_13 : f32 to vector<1x128xf32>
    %33 = arith.maximumf %31, %32 : vector<1x128xf32>
    %cst_14 = arith.constant 9.99999974E-6 : f32
    %34 = vector.broadcast %cst_14 : f32 to vector<1x128xf32>
    %35 = arith.addf %33, %34 : vector<1x128xf32>
    %36 = math.rsqrt %35 : vector<1x128xf32>
    %37 = arith.mulf %8, %36 : vector<1x128xf32>
    %38 = arith.mulf %24, %37 : vector<1x128xf32>
    %39 = arith.subf %9, %38 : vector<1x128xf32>
    %40 = vector.broadcast %37 : vector<1x128xf32> to vector<8x128xf32>
    %41 = arith.mulf %20, %40 : vector<8x128xf32>
    %42 = vector.broadcast %39 : vector<1x128xf32> to vector<8x128xf32>
    %43 = arith.addf %41, %42 : vector<8x128xf32>
    %c0_15 = arith.constant 0 : index
    %c0_16 = arith.constant 0 : index
    %44 = vector.load %arg5[%c0_15, %c0_16] : memref<8x128xf32, #tpu.memory_space<vmem>>, vector<8x128xf32>
    tpu.vector_store %arg5[%c0_15, %c0_16], %43 {strides = array<i32>} : memref<8x128xf32, #tpu.memory_space<vmem>>, vector<8x128xf32>,
    %c1_i32 = arith.constant 1 : i32
    %45 = arith.cmpi eq, %arg0, %c1_i32 : i32
    %46 = arith.extui %45 : i1 to i32
    %c0_i32_17 = arith.constant 0 : i32
    %47 = arith.cmpi ne, %46, %c0_i32_17 : i32
    scf.if %47 {
      %c0_18 = arith.constant 0 : index
      %c0_19 = arith.constant 0 : index
      %48 = vector.load %arg4[%c0_18, %c0_19] : memref<8x128xf32, #tpu.memory_space<vmem>>, vector<8x128xf32>
      tpu.vector_store %arg4[%c0_18, %c0_19], %43 {strides = array<i32>} : memref<8x128xf32, #tpu.memory_space<vmem>>, vector<8x128xf32>,
    } else {
    }
    return
  }
  func.func @transform_0(%arg0: i32) -> (i32, i32) {
    %c0_i32 = arith.constant 0 : i32
    %c0_i32_0 = arith.constant 0 : i32
    %c0_i32_1 = arith.constant 0 : i32
    return %c0_i32, %c0_i32_0 : i32, i32
  }
  func.func @transform_1(%arg0: i32) -> (i32, i32, i32) {
    %c0_i32 = arith.constant 0 : i32
    %c0_i32_0 = arith.constant 0 : i32
    %c0_i32_1 = arith.constant 0 : i32
    return %arg0, %c0_i32, %c0_i32_0 : i32, i32, i32
  }
  func.func @transform_2(%arg0: i32) -> (i32, i32, i32) {
    %c0_i32 = arith.constant 0 : i32
    %c0_i32_0 = arith.constant 0 : i32
    %c0_i32_1 = arith.constant 0 : i32
    return %arg0, %c0_i32, %c0_i32_0 : i32, i32, i32
  }
  func.func @transform_3(%arg0: i32) -> (i32, i32) {
    %c0_i32 = arith.constant 0 : i32
    %c0_i32_0 = arith.constant 0 : i32
    %c0_i32_1 = arith.constant 0 : i32
    return %c0_i32, %c0_i32_0 : i32, i32
  }
}

</mosaic_0001>

<llo_original>
// kernel: linear_stack_forward.1
$region0: #{linear_stack_forward.1}
  #allocation0 [shape = 'u32[]', space=smem, size = 0x4, offset = 0x4, fixed_abs, tag = 'smem constant byte address 0x4 - core index']
  #allocation1 [shape = 'u32[144,128]{1,0:T(1,128)}', space=vmem, size = 0x12000, scoped, tag = 'internal scratch']
  #allocation2 [shape = 'f32[8,128]{1,0:T(8,128)}', space=vmem, size = 0x1000, scoped, tag = 'scratch operand']
  %s0 = inlined_call_operand.vmem [shape: f32[8,128], index: 0, kind: input, shape index: {}]
  %s1 = inlined_call_operand.hbm [shape: bf16[2,128,128], index: 1, kind: input, shape index: {}]
  %s2 = inlined_call_operand.vmem [shape: f32[2,8,128], index: 2, kind: input, shape index: {}]
  %s3 = inlined_call_operand.hbm [shape: f32[8,128], index: 3, kind: output, shape index: {}]
  %s4 = sld [smem:[#allocation0]]
  $region57: #{linear_stack_forward.1} parent=0
    _
  %s6 = ssub.s32 1, %s4
  %s7 = scalar_select 0, %s6, %s4
  $region1: #{linear_stack_forward.1} parent=0
    #allocation3 [shape = 'u8[65536]{0}', space=vmem, size = 0x10000, scoped, tag = 'input window, operand 1']
    #allocation4 [shape = 's32[2]{0}', space=sflag, size = 0x8, scoped, tag = 'scoped memory for linear_stack_forward.1']
    #allocation5 [shape = 's32[2]{0}', space=sflag, size = 0x8, scoped, tag = 'scoped memory for linear_stack_forward.1']
    #allocation6 [shape = 'u8[4096]{0}', space=vmem, size = 0x1000, scoped, tag = 'output window, operand 0, single buffered']
    %8 = vsyncpa [#allocation4], 0
    %s9 = scalar_lea.sflag [#allocation4], 1
    %10 = vsyncpa %s9, 0
    %11 = vsyncpa [#allocation5], 0
    loop: start=0, step=1, limit=4
    $region2: #{linear_stack_forward.1} parent=1 // loop_pre_header
      _
    $region3: #{linear_stack_forward.1} parent=1 // loop_header
      %s13 = sphi 0, %s17
      %p14 = scmp.ge.s32.totalorder %s13, 4
      %s21 = sphi 0, %s21
      %s23 = sphi 0, %s21
      %s24 = sphi 0, %s23
      %s38 = sphi 0, %s24
      %s44 = sphi 0, %s46
      %s47 = sphi 0, %s44
      %s48 = sphi 0, %s47
      %s64 = sphi 0, %s48
      %s70 = sphi 0, %s72
      %s73 = sphi 0, %s70
      %s74 = sphi 0, %s73
      %s90 = sphi 0, %s74
      %s94 = sphi 0, %s94
      %s96 = sphi 0, %s94
      %s97 = sphi 0, %s96
      %s111 = sphi 0, %s97
    $region4: #{linear_stack_forward.1} parent=1 // loop_header_branch
      %16 = sbr.rel (%p14) target = $region8
    $region5: #{linear_stack_forward.1} parent=1 // loop_body
      %s18 = ssub.s32 %s13, 1
      %s19 = ssub.s32 %s13, 2
      %s20 = sadd.s32 %s13, 1
      %s22 = sadd.s32 %s21, 1
      %p25 = scmp.eq.s32.totalorder %s13, 1
      %p26 = scmp.ne.s32.totalorder %s21, %s23
      %p27 = scmp.eq.s32.totalorder %s13, 0
      %p28 = por %p26, %p27
      %p29 = scmp.ne.s32.totalorder %s21, %s23
      %p30 = scmp.eq.s32.totalorder %s18, 1
      %p31 = por %p29, %p30
      %p32 = scmp.ne.s32.totalorder %s23, %s24
      %p33 = scmp.eq.s32.totalorder %s18, 0
      %p34 = por %p32, %p33
      %p35 = scmp.ne.s32.totalorder %s23, %s24
      %p36 = scmp.eq.s32.totalorder %s19, 1
      %p37 = por %p35, %p36
      %p39 = scmp.ne.s32.totalorder %s24, %s38
      %p40 = scmp.eq.s32.totalorder %s19, 0
      %p41 = por %p39, %p40
      %s42 = ssub.s32 %s13, %s20
      %p43 = scmp.eq.s32.totalorder %s42, 0
      %s45 = sadd.s32 %s44, 1
      %s46 = scalar_select %p43, %s44, %s45
      %p49 = pneg %p43
      %p50 = scmp.eq.s32.totalorder %s13, 1
      %p51 = por %p49, %p50
      %p52 = scmp.ne.s32.totalorder %s44, %s47
      %p53 = scmp.eq.s32.totalorder %s13, 0
      %p54 = por %p52, %p53
      %p55 = scmp.ne.s32.totalorder %s44, %s47
      %p56 = scmp.eq.s32.totalorder %s18, 1
      %p57 = por %p55, %p56
      %p58 = scmp.ne.s32.totalorder %s47, %s48
      %p59 = scmp.eq.s32.totalorder %s18, 0
      %p60 = por %p58, %p59
      %p61 = scmp.ne.s32.totalorder %s47, %s48
      %p62 = scmp.eq.s32.totalorder %s19, 1
      %p63 = por %p61, %p62
      %p65 = scmp.ne.s32.totalorder %s48, %s64
      %p66 = scmp.eq.s32.totalorder %s19, 0
      %p67 = por %p65, %p66
      %s68 = ssub.s32 %s13, %s20
      %p69 = scmp.eq.s32.totalorder %s68, 0
      %s71 = sadd.s32 %s70, 1
      %s72 = scalar_select %p69, %s70, %s71
      %p75 = pneg %p69
      %p76 = scmp.eq.s32.totalorder %s13, 1
      %p77 = por %p75, %p76
      %p78 = scmp.ne.s32.totalorder %s70, %s73
      %p79 = scmp.eq.s32.totalorder %s13, 0
      %p80 = por %p78, %p79
      %p81 = scmp.ne.s32.totalorder %s70, %s73
      %p82 = scmp.eq.s32.totalorder %s18, 1
      %p83 = por %p81, %p82
      %p84 = scmp.ne.s32.totalorder %s73, %s74
      %p85 = scmp.eq.s32.totalorder %s18, 0
      %p86 = por %p84, %p85
      %p87 = scmp.ne.s32.totalorder %s73, %s74
      %p88 = scmp.eq.s32.totalorder %s19, 1
      %p89 = por %p87, %p88
      %p91 = scmp.ne.s32.totalorder %s74, %s90
      %p92 = scmp.eq.s32.totalorder %s19, 0
      %p93 = por %p91, %p92
      %s95 = sadd.s32 %s94, 1
      %p98 = scmp.eq.s32.totalorder %s13, 1
      %p99 = scmp.ne.s32.totalorder %s94, %s96
      %p100 = scmp.eq.s32.totalorder %s13, 0
      %p101 = por %p99, %p100
      %p102 = scmp.ne.s32.totalorder %s94, %s96
      %p103 = scmp.eq.s32.totalorder %s18, 1
      %p104 = por %p102, %p103
      %p105 = scmp.ne.s32.totalorder %s96, %s97
      %p106 = scmp.eq.s32.totalorder %s18, 0
      %p107 = por %p105, %p106
      %p108 = scmp.ne.s32.totalorder %s96, %s97
      %p109 = scmp.eq.s32.totalorder %s19, 1
      %p110 = por %p108, %p109
      %p112 = scmp.ne.s32.totalorder %s97, %s111
      %p113 = scmp.eq.s32.totalorder %s19, 0
      %p114 = por %p112, %p113
      %p115 = scmp.le.s32.totalorder 1, %s13
      %p116 = scmp.lt.s32.totalorder %s13, 3
      %p117 = pnand %p115, %p116
      %p118 = pneg %p117
      // Predicated region
      $region9: #{linear_stack_forward.1} parent=5 // pred_check
        _
      $region10: #{linear_stack_forward.1} parent=5 // pred_check_branch
        %120 = sbr.rel (%p117) target = $region12
      $region11: #{linear_stack_forward.1} parent=5 // pred_region
        %s121 = ssub.s32 %s13, 1
        // Predicated region
        $region13: #{linear_stack_forward.1} parent=11 // pred_check
          %p122 = pneg %p34
        $region14: #{linear_stack_forward.1} parent=11 // pred_check_branch
          %124 = sbr.rel (%p122) target = $region16
        $region15: #{linear_stack_forward.1} parent=11 // pred_region
          _
        $region16: #{linear_stack_forward.1} parent=11 // pred_fallthru
          _
      $region12: #{linear_stack_forward.1} parent=5 // pred_fallthru
        _
      %p125 = scmp.lt.s32.totalorder %s13, 2
      // Predicated region
      $region17: #{linear_stack_forward.1} parent=5 // pred_check
        %p126 = pneg %p125
      $region18: #{linear_stack_forward.1} parent=5 // pred_check_branch
        %128 = sbr.rel (%p126) target = $region20
      $region19: #{linear_stack_forward.1} parent=5 // pred_region
        // Predicated region
        $region21: #{linear_stack_forward.1} parent=19 // pred_check
          %p129 = pneg %p54
        $region22: #{linear_stack_forward.1} parent=19 // pred_check_branch
          %131 = sbr.rel (%p129) target = $region24
        $region23: #{linear_stack_forward.1} parent=19 // pred_region
          %s132 = sand.u32 %s44, 1
          %s133 = scalar_lea.sflag [#allocation4], %s132
          %s134 = sand.u32 %s44, 1
          %s135 = smul.addr %s134, 64
          %s136 = scalar_lea.vmem [#allocation3], %s135
          %s138 = ssub.s32 1024, 1024
          %139 = vsyncadd %s133, %s138
          %s140 = smul.addr %s13, 16
          %s141 = smul.addr %s140, 64
          %s142 = scalar_lea.hbm %s1, %s141
          %s143 = sshll.u32 %s136, 4
          %s144 = int_to_ptr.vmem [resolvable:$true] %s143
          %149 = dma.hbm_to_vmem [thread:$0]  %s142, 1024, %s144, %s133, 64, 64, 4
        $region24: #{linear_stack_forward.1} parent=19 // pred_fallthru
          _
        // Predicated region
        $region25: #{linear_stack_forward.1} parent=19 // pred_check
          %p150 = pneg %p80
        $region26: #{linear_stack_forward.1} parent=19 // pred_check_branch
          %152 = sbr.rel (%p150) target = $region28
        $region27: #{linear_stack_forward.1} parent=19 // pred_region
          %p153 = scmp.lt.s32.totalorder %s13, 1
          %s154 = scalar_select %p153, %s13, 1
          %s155 = smul.addr %s154, 8
          %s156 = scalar_lea.vmem %s2, %s155
        $region28: #{linear_stack_forward.1} parent=19 // pred_fallthru
          _
      $region20: #{linear_stack_forward.1} parent=5 // pred_fallthru
        _
      %p157 = scmp.le.s32.totalorder 1, %s13
      %p158 = scmp.lt.s32.totalorder %s13, 3
      %p159 = pnand %p157, %p158
      %p160 = pneg %p159
      // Predicated region
      $region29: #{linear_stack_forward.1} parent=5 // pred_check
        _
      $region30: #{linear_stack_forward.1} parent=5 // pred_check_branch
        %162 = sbr.rel (%p159) target = $region32
      $region31: #{linear_stack_forward.1} parent=5 // pred_region
        %s163 = ssub.s32 %s13, 1
        %s164 = sand.u32 %s47, 1
        %s165 = scalar_lea.sflag [#allocation4], %s164
        %s166 = sand.u32 %s47, 1
        %s167 = smul.addr %s166, 64
        %s168 = scalar_lea.vmem [#allocation3], %s167
        // Predicated region
        $region33: #{linear_stack_forward.1} parent=31 // pred_check
          %p169 = pneg %p60
        $region34: #{linear_stack_forward.1} parent=31 // pred_check_branch
          %171 = sbr.rel (%p169) target = $region36
        $region35: #{linear_stack_forward.1} parent=31 // pred_region
          %172 = dma.done %s165, 1024
        $region36: #{linear_stack_forward.1} parent=31 // pred_fallthru
          _
        %p173 = pneg %p34
        %p174 = pneg %p31
        %s175 = sand.u32 %s47, 1
        %s176 = scalar_lea.sflag [#allocation4], %s175
        %s177 = sand.u32 %s47, 1
        %s178 = smul.addr %s177, 64
        %s179 = scalar_lea.vmem [#allocation3], %s178
        %p180 = pneg %p60
        %p181 = pneg %p57
        %p182 = scmp.lt.s32.totalorder %s18, 1
        %s183 = scalar_select %p182, %s18, 1
        %s184 = smul.addr %s183, 8
        %s185 = scalar_lea.vmem %s2, %s184
        %p186 = pneg %p86
        %p187 = pneg %p83
        %p188 = pneg %p107
        %p189 = pneg %p104
        %p190 = scmp.lt.s32.totalorder %s18, 1
        %s191 = scalar_select %p190, %s18, 1
        %s192 = smul.addr %s191, 8
        %s193 = scalar_lea.vmem %s2, %s192
        %p195 = scmp.eq.s32.totalorder %s18, 0
        // Predicated region
        $region37: #{linear_stack_forward.1} parent=31 // pred_check
          %p196 = pneg %p195
        $region38: #{linear_stack_forward.1} parent=31 // pred_check_branch
          %198 = sbr.rel (%p196) target = $region40
        $region39: #{linear_stack_forward.1} parent=31 // pred_region
          %v199 = vld [vmem:[%s0] sm:$0xff]
          %200 = vst [vmem:[#allocation2] sm:$0xff] %v199
        $region40: #{linear_stack_forward.1} parent=31 // pred_fallthru
          _
        %v201 = vld [vmem:[%s168] sm:$0xf]
        %v202 = vld [vmem:[%s168 + $0x4] sm:$0xf]
        %v203 = vld [vmem:[%s168 + $0x8] sm:$0xf]
        %v204 = vld [vmem:[%s168 + $0xc] sm:$0xf]
        %v205 = vld [vmem:[%s168 + $0x10] sm:$0xf]
        %v206 = vld [vmem:[%s168 + $0x14] sm:$0xf]
        %v207 = vld [vmem:[%s168 + $0x18] sm:$0xf]
        %v208 = vld [vmem:[%s168 + $0x1c] sm:$0xf]
        %v209 = vld [vmem:[%s168 + $0x20] sm:$0xf]
        %v210 = vld [vmem:[%s168 + $0x24] sm:$0xf]
        %v211 = vld [vmem:[%s168 + $0x28] sm:$0xf]
        %v212 = vld [vmem:[%s168 + $0x2c] sm:$0xf]
        %v213 = vld [vmem:[%s168 + $0x30] sm:$0xf]
        %v214 = vld [vmem:[%s168 + $0x34] sm:$0xf]
        %v215 = vld [vmem:[%s168 + $0x38] sm:$0xf]
        %v216 = vld [vmem:[%s168 + $0x3c] sm:$0xf]
        %v217 = vld [vmem:[%s193] sm:$0xff]
        %v218 = vld [vmem:[#allocation2] sm:$0xff]
        %v219 = vpack.c.bf16 %v218, %v218
        %v220 = vlaneseq
        %v221 = vshrl.u32 %v220, 7
        %v222 = vsub.s32 0, %v221
        %v223 = vrot.slane %v217, %v222
        %v240 = vunpack.c.l.b16 %v201
        %v241 = vunpack.c.l.b16 %v202
        %v242 = vunpack.c.l.b16 %v203
        %v243 = vunpack.c.l.b16 %v204
        %v244 = vunpack.c.l.b16 %v205
        %v245 = vunpack.c.l.b16 %v206
        %v246 = vunpack.c.l.b16 %v207
        %v247 = vunpack.c.l.b16 %v208
        %v248 = vunpack.c.l.b16 %v209
        %v249 = vunpack.c.l.b16 %v210
        %v250 = vunpack.c.l.b16 %v211
        %v251 = vunpack.c.l.b16 %v212
        %v252 = vunpack.c.l.b16 %v213
        %v253 = vunpack.c.l.b16 %v214
        %v254 = vunpack.c.l.b16 %v215
        %v255 = vunpack.c.l.b16 %v216
        %v256 = vpack.c.b16 %v241, %v240
        %v257 = vpack.c.b16 %v243, %v242
        %v258 = vpack.c.b16 %v245, %v244
        %v259 = vpack.c.b16 %v247, %v246
        %v260 = vpack.c.b16 %v249, %v248
        %v261 = vpack.c.b16 %v251, %v250
        %v262 = vpack.c.b16 %v253, %v252
        %v263 = vpack.c.b16 %v255, %v254
        %272 = vmatprep.subr.bf16.mxu0 0
        %273 = vmatpush1.bf16.msra.mxu0 %v263
        %274 = vmatprep.subr.bf16.mxu0 0
        %275 = vmatpush1.bf16.msra.mxu0 %v262
        %276 = vmatprep.subr.bf16.mxu0 0
        %277 = vmatpush1.bf16.msra.mxu0 %v261
        %278 = vmatprep.subr.bf16.mxu0 0
        %279 = vmatpush1.bf16.msra.mxu0 %v260
        %280 = vmatprep.subr.bf16.mxu0 0
        %281 = vmatpush1.bf16.msra.mxu0 %v259
        %282 = vmatprep.subr.bf16.mxu0 0
        %283 = vmatpush1.bf16.msra.mxu0 %v258
        %284 = vmatprep.subr.bf16.mxu0 0
        %285 = vmatpush1.bf16.msra.mxu0 %v257
        %286 = vmatprep.subr.bf16.mxu0 0
        %287 = vmatpush1.bf16.msra.mxu0 %v256
        %288 = vmatprep.subr.bf16.mxu0 0
        %289 = vmatpush2.bf16.msra.mxu0 0
        %290 = vmatprep.subr.bf16.mxu0 0
        %291 = vmatpush2.bf16.msra.mxu0 0
        %292 = vmatprep.subr.bf16.mxu0 0
        %293 = vmatpush2.bf16.msra.mxu0 0
        %294 = vmatprep.subr.bf16.mxu0 0
        %295 = vmatpush2.bf16.msra.mxu0 0
        %296 = vmatprep.subr.bf16.mxu0 0
        %297 = vmatpush2.bf16.msra.mxu0 0
        %298 = vmatprep.subr.bf16.mxu0 0
        %299 = vmatpush2.bf16.msra.mxu0 0
        %300 = vmatprep.subr.bf16.mxu0 0
        %301 = vmatpush2.bf16.msra.mxu0 0
        %302 = vmatprep.subr.bf16.mxu0 0
        %303 = vmatpush2.bf16.msra.mxu0 0
        %304 = vmatprep.mubr.bf16.mxu0 0
        %305 = vmatmul.mubr.bf16.gmra.mxu0 %v219
        %v306 = vpop.f32.mrf.mxu0
        %v307 = vadd.f32 %v223, %v306
        %v308 = vpop.f32.mrf.mxu0
        %v309 = vpop.f32.mrf.mxu0
        %v310 = vpop.f32.mrf.mxu0
        %311 = vdwg.mxu0
        %v312 = vxor.u32 %v307, 2147483648
        %v313 = vmul.f32 %v312, 1.442695
        %v314 = vpow.pop %v313
        %v315 = vadd.f32 %v314, 1.0
        %v316 = vrcp.pop %v315
        %v317 = vmul.f32 1.0, %v316
        %v318 = vmul.f32 %v307, %v317
        %v319 = vrot.slane %v318, 4
        %v320 = vadd.f32 %v318, %v319
        %v321 = vrot.slane %v320, 2
        %v322 = vadd.f32 %v320, %v321
        %v323 = vrot.slane %v322, 1
        %v324 = vadd.f32 %v322, %v323
        %v325 = vmul.f32 %v324, 0.125
        %v326 = vmul.f32 %v318, %v318
        %v327 = vrot.slane %v326, 4
        %v328 = vadd.f32 %v326, %v327
        %v329 = vrot.slane %v328, 2
        %v330 = vadd.f32 %v328, %v329
        %v331 = vrot.slane %v330, 1
        %v332 = vadd.f32 %v330, %v331
        %v333 = vmul.f32 %v332, 0.125
        %v334 = vmul.f32 %v325, %v325
        %v335 = vsub.f32 %v333, %v334
        %v336 = vmax.f32 %v335, 0.0
        %v337 = vadd.f32 %v336, 1e-05
        %v338 = vrsqrt.pop %v337
        %v339 = vmul.f32 %v217, %v338
        %v340 = vmul.f32 %v325, %v339
        %v342 = vrot.slane %v340, 7
        %v344 = vsub.f32 %v217, %v342
        %v345 = vlaneseq
        %v346 = vshrl.u32 %v345, 7
        %v347 = vsub.s32 1, %v346
        %v348 = vrot.slane %v339, %v347
        %v349 = vmul.f32 %v318, %v348
        %v350 = vlaneseq
        %v351 = vshrl.u32 %v350, 7
        %v352 = vsub.s32 2, %v351
        %v353 = vrot.slane %v344, %v352
        %v354 = vadd.f32 %v349, %v353
        %355 = vst [vmem:[#allocation2] sm:$0xff] %v354
        %p356 = scmp.eq.s32.totalorder %s18, 1
        // Predicated region
        $region41: #{linear_stack_forward.1} parent=31 // pred_check
          %p357 = pneg %p356
        $region42: #{linear_stack_forward.1} parent=31 // pred_check_branch
          %359 = sbr.rel (%p357) target = $region44
        $region43: #{linear_stack_forward.1} parent=31 // pred_region
          %360 = vst [vmem:[#allocation6] sm:$0xff] %v354
        $region44: #{linear_stack_forward.1} parent=31 // pred_fallthru
          _
        // Predicated region
        $region45: #{linear_stack_forward.1} parent=31 // pred_check
          %p361 = pneg %p104
        $region46: #{linear_stack_forward.1} parent=31 // pred_check_branch
          %363 = sbr.rel (%p361) target = $region48
        $region47: #{linear_stack_forward.1} parent=31 // pred_region
          %s365 = ssub.s32 128, 128
          %366 = vsyncadd [#allocation5], %s365
          %s368 = sshll.u32 [#allocation6], 4
          %s369 = int_to_ptr.vmem [resolvable:$true] %s368
          %371 = dma.vmem_to_hbm [thread:$0]  %s369, 128, %s3, [#allocation5]
        $region48: #{linear_stack_forward.1} parent=31 // pred_fallthru
          _
        // Predicated region
        $region49: #{linear_stack_forward.1} parent=31 // pred_check
          %p372 = pneg %p104
        $region50: #{linear_stack_forward.1} parent=31 // pred_check_branch
          %374 = sbr.rel (%p372) target = $region52
        $region51: #{linear_stack_forward.1} parent=31 // pred_region
          %375 = dma.done [#allocation5], 128
        $region52: #{linear_stack_forward.1} parent=31 // pred_fallthru
          _
      $region32: #{linear_stack_forward.1} parent=5 // pred_fallthru
        _
      %p376 = scmp.le.s32.totalorder 2, %s13
      // Predicated region
      $region53: #{linear_stack_forward.1} parent=5 // pred_check
        %p377 = pneg %p376
      $region54: #{linear_stack_forward.1} parent=5 // pred_check_branch
        %379 = sbr.rel (%p377) target = $region56
      $region55: #{linear_stack_forward.1} parent=5 // pred_region
        %s380 = ssub.s32 %s13, 2
      $region56: #{linear_stack_forward.1} parent=5 // pred_fallthru
        _
    $region6: #{linear_stack_forward.1} parent=1 // loop_footer
      %s17 = sadd.s32 1, %s13
    $region7: #{linear_stack_forward.1} parent=1 // loop_footer_branch
      %12 = sbr.rel target = $region3
    $region8: #{linear_stack_forward.1} parent=1 // loop_exit
      _
    %381 = vsyncpa [#allocation4], 1
    %s382 = scalar_lea.sflag [#allocation4], 1
    %383 = vsyncpa %s382, 1
    %384 = vsyncpa [#allocation5], 1
    %s385 = scalar_lea.sflag [#allocation5], 1
    %386 = vsyncpa %s385, 1

</llo_original>
